<compile_context>
chip_gen: v5e
topology: v5e:2x2
jax: 0.10.0
libtpu: 0.0.40
codegen_flags: <defaults>
</compile_context>

<pallas_src>
import functools

import jax
import jax.numpy as jnp
from jax.experimental import pallas as pl
from jax.experimental.pallas import tpu as pltpu


def _round_up(x, m):
    return ((x + m - 1) // m) * m


def _proj_enc_kernel(y_ref, w1_ref, b1_ref, w2_ref, b2_ref, out_ref, *, compute_dtype):
    # lin1 -> ELU -> lin2 -> sigmoid on one (tn, in_dim) row tile.
    # Operands already in compute_dtype (cast in the wrapper); accumulate in f32.
    h = jnp.dot(y_ref[...], w1_ref[...], preferred_element_type=jnp.float32)
    h = h + b1_ref[...]
    # ELU(alpha=1); exp only ever sees non-positive inputs -> no overflow in the
    # unselected branch.  Padded hidden columns stay exactly 0 (ELU(0)=0).
    h = jnp.where(h > 0, h, jnp.exp(jnp.minimum(h, 0.0)) - 1.0)
    h = jnp.dot(h.astype(compute_dtype), w2_ref[...], preferred_element_type=jnp.float32)
    h = h + b2_ref[...]
    # sigmoid(h) = 1 / (1 + exp(-h)); exp + approx reciprocal both land on the EUP.
    e = jnp.exp(-h)
    out_ref[...] = pl.reciprocal(1.0 + e, approx=True).astype(out_ref.dtype)


def init_params(key, in_dim, hid_dim, out_dim, dtype=jnp.float32):
    """nn.Linear-style init (uniform +/- 1/sqrt(fan_in)); weights stored (fan_in, fan_out)."""
    dims = [(in_dim, hid_dim), (hid_dim, out_dim)]
    params = []
    for fan_in, fan_out in dims:
        key, kw, kb = jax.random.split(key, 3)
        bound = 1.0 / float(fan_in) ** 0.5
        w = jax.random.uniform(kw, (fan_in, fan_out), dtype, -bound, bound)
        b = jax.random.uniform(kb, (fan_out,), dtype, -bound, bound)
        params.append((w, b))
    return params


@functools.partial(
    jax.jit, static_argnames=("tile_n", "compute_dtype", "single_buffer_weights"))
def _proj_enc_impl(y, w1, b1, w2, b2, *, tile_n, compute_dtype, single_buffer_weights):
    in_dim, hid_dim = w1.shape
    out_dim = w2.shape[1]
    lead = y.shape[:-1]
    out_dtype = y.dtype

    act_dt = jnp.dtype(compute_dtype)
    align = 16 if act_dt.itemsize < 4 else 8          # packed bf16 rows travel in pairs

    # Lane-dense feature dims (multiples of 128); padding is zeros so the math
    # is unchanged (padded hidden cols -> ELU(0)=0 -> zero rows of w2 -> 0).
    hid_pad = _round_up(hid_dim, 128)
    out_pad = _round_up(out_dim, 128)

    # Wrapper-side casting: stream/resident data already in compute_dtype.
    y2 = y.reshape(-1, in_dim).astype(act_dt)
    n_rows = y2.shape[0]

    w1p = jnp.pad(w1, ((0, 0), (0, hid_pad - hid_dim))).astype(act_dt)
    w2p = jnp.pad(w2, ((0, hid_pad - hid_dim), (0, out_pad - out_dim))).astype(act_dt)
    b1p = jnp.pad(b1, (0, hid_pad - hid_dim)).astype(jnp.float32).reshape(1, hid_pad)
    b2p = jnp.pad(b2, (0, out_pad - out_dim)).astype(jnp.float32).reshape(1, out_pad)

    # ---------------- row-tile selection ----------------
    tn = _round_up(min(max(tile_n, align), _round_up(max(n_rows, 1), align)), align)

    out_isz = jnp.dtype(out_dtype).itemsize
    weight_bytes = ((in_dim * hid_pad + hid_pad * out_pad) * act_dt.itemsize
                    + 4 * (hid_pad + out_pad))
    per_row = (2 * in_dim * act_dt.itemsize           # double-buffered input tile
               + 2 * out_pad * out_isz                # double-buffered output tile
               + 2 * hid_pad * 4 + out_pad * 4)       # f32 intermediates
    budget = 32 << 20                                  # conservative: fits v7x 64 MiB/TC
    tn_cap = max(align,
                 ((max(budget - 2 * weight_bytes, 1 << 20)) // per_row) // align * align)
    tn = min(tn, tn_cap)

    # Keep >= 2 grid steps when the batch allows it so the "parallel" row axis
    # can actually feed both TensorCores (v7x megacore).
    if n_rows > 2 * align and _round_up(n_rows, align) <= tn:
        tn = _round_up(-(-n_rows // 2), align)

    n_pad = _round_up(max(n_rows, 1), tn)
    if n_pad != n_rows:
        y2 = jnp.pad(y2, ((0, n_pad - n_rows), (0, 0)))

    grid = (n_pad // tn,)

    vmem_limit = int(min(64 << 20,
                         max(32 << 20, 2 * weight_bytes + tn * per_row + (4 << 20))))

    cost = pl.CostEstimate(
        flops=2 * n_pad * (in_dim * hid_pad + hid_pad * out_pad),
        transcendentals=n_pad * (hid_pad + out_pad),   # ELU exp + sigmoid exp
        bytes_accessed=(n_pad * in_dim * act_dt.itemsize
                        + n_pad * out_pad * out_isz
                        + weight_bytes),
    )

    # Weights/biases never change block index -> single-buffer them when supported.
    wkw = {"pipeline_mode": pl.Buffered(1)} if single_buffer_weights else {}

    kernel = functools.partial(_proj_enc_kernel, compute_dtype=act_dt)

    out = pl.pallas_call(
        kernel,
        out_shape=jax.ShapeDtypeStruct((n_pad, out_pad), out_dtype),
        grid=grid,
        in_specs=[
            pl.BlockSpec((tn, in_dim), lambda i: (i, 0)),              # streamed rows
            pl.BlockSpec((in_dim, hid_pad), lambda i: (0, 0), **wkw),  # resident weights
            pl.BlockSpec((1, hid_pad), lambda i: (0, 0), **wkw),
            pl.BlockSpec((hid_pad, out_pad), lambda i: (0, 0), **wkw),
            pl.BlockSpec((1, out_pad), lambda i: (0, 0), **wkw),
        ],
        out_specs=pl.BlockSpec((tn, out_pad), lambda i: (i, 0)),
        compiler_params=pltpu.CompilerParams(
            dimension_semantics=("parallel",),
            vmem_limit_bytes=vmem_limit),
        cost_estimate=cost,
    )(y2, w1p, b1p, w2p, b2p)

    return out[:n_rows, :out_dim].reshape(*lead, out_dim)


def proj_enc_forward(y, params, *, tile_n=1024, compute_dtype=jnp.bfloat16):
    """out = sigmoid(lin2(ELU(lin1(y)))), matching Proj_enc.forward."""
    (w1, b1), (w2, b2) = params
    try:
        return _proj_enc_impl(y, w1, b1, w2, b2, tile_n=tile_n,
                              compute_dtype=compute_dtype, single_buffer_weights=True)
    except Exception:
        # pl.Buffered(1) not accepted by this JAX/Mosaic build -> default buffering.
        return _proj_enc_impl(y, w1, b1, w2, b2, tile_n=tile_n,
                              compute_dtype=compute_dtype, single_buffer_weights=False)


def reference_forward(y, params):
    """Pure-JAX reference (same math, f32)."""
    (w1, b1), (w2, b2) = params
    h = y @ w1 + b1
    h = jnp.where(h > 0, h, jnp.exp(jnp.minimum(h, 0.0)) - 1.0)
    h = h @ w2 + b2
    return 1.0 / (1.0 + jnp.exp(-h))


if __name__ == "__main__":
    in_dim, hid_dim, out_dim = 8, 32, 16
    batch, seq = 2, 8

    key = jax.random.PRNGKey(0)
    kp, ky = jax.random.split(key)

    params = init_params(kp, in_dim, hid_dim, out_dim)
    y = jax.random.normal(ky, (batch, seq, in_dim), jnp.float32)

    ref = reference_forward(y, params)

    # Default path: bf16 MXU operands, f32 accumulation / elementwise.
    out = jax.block_until_ready(proj_enc_forward(y, params))
    assert out.shape == (batch, seq, out_dim), out.shape
    assert out.dtype == y.dtype, out.dtype
    assert jnp.allclose(out, ref, atol=3e-2, rtol=3e-2), (
        float(jnp.max(jnp.abs(out - ref))))

    # f32 MXU path: tight agreement with the pure-JAX reference.
    out_f32 = jax.block_until_ready(
        proj_enc_forward(y, params, compute_dtype=jnp.float32))
    assert jnp.allclose(out_f32, ref, atol=2e-3, rtol=2e-3), (
        float(jnp.max(jnp.abs(out_f32 - ref))))

    print("KERNEL_OK")
</pallas_src>

<mosaic_0001>
module attributes {stable_mosaic.version = 11 : i64} {
  func.func @_proj_enc_kernel(%arg0: i32, %arg1: memref<16x8xbf16, #tpu.memory_space<vmem>>, %arg2: memref<8x128xbf16, #tpu.memory_space<vmem>>, %arg3: memref<1x128xf32, #tpu.memory_space<vmem>>, %arg4: memref<128x128xbf16, #tpu.memory_space<vmem>>, %arg5: memref<1x128xf32, #tpu.memory_space<vmem>>, %arg6: memref<16x128xf32, #tpu.memory_space<vmem>>) attributes {dimension_semantics = [#tpu.dimension_semantics<parallel>], iteration_bounds = array<i64: 1>, scalar_prefetch = 0 : i64, scratch_operands = 0 : i64, tpu.core_type = #tpu.core_type<tc>, window_params = [{transform_indices = @transform_0, window_bounds = array<i64: 16, 8>}, {pipeline_mode = #tpu.pipeline_mode<synchronous>, transform_indices = @transform_1, window_bounds = array<i64: 8, 128>}, {pipeline_mode = #tpu.pipeline_mode<synchronous>, transform_indices = @transform_2, window_bounds = array<i64: 1, 128>}, {pipeline_mode = #tpu.pipeline_mode<synchronous>, transform_indices = @transform_3, window_bounds = array<i64: 128, 128>}, {pipeline_mode = #tpu.pipeline_mode<synchronous>, transform_indices = @transform_4, window_bounds = array<i64: 1, 128>}, {transform_indices = @transform_5, window_bounds = array<i64: 16, 128>}]} {
    %c0 = arith.constant 0 : index
    %c0_0 = arith.constant 0 : index
    %0 = vector.load %arg1[%c0, %c0_0] : memref<16x8xbf16, #tpu.memory_space<vmem>>, vector<16x8xbf16>
    %c0_1 = arith.constant 0 : index
    %c0_2 = arith.constant 0 : index
    %1 = vector.load %arg2[%c0_1, %c0_2] : memref<8x128xbf16, #tpu.memory_space<vmem>>, vector<8x128xbf16>
    %cst = arith.constant dense<0.000000e+00> : vector<16x128xf32>
    %2 = tpu.matmul %0, %1, %cst {dimension_numbers = #tpu.dot_dimension_numbers<[1], [0], [0], [1], [0, 0, 1, 1], [], []>} : vector<16x8xbf16>, vector<8x128xbf16>, vector<16x128xf32> -> vector<16x128xf32>
    %c0_3 = arith.constant 0 : index
    %c0_4 = arith.constant 0 : index
    %3 = vector.load %arg3[%c0_3, %c0_4] : memref<1x128xf32, #tpu.memory_space<vmem>>, vector<1x128xf32>
    %4 = vector.broadcast %3 : vector<1x128xf32> to vector<16x128xf32>
    %5 = arith.addf %2, %4 : vector<16x128xf32>
    %cst_5 = arith.constant 0.000000e+00 : f32
    %6 = vector.broadcast %cst_5 : f32 to vector<16x128xf32>
    %7 = arith.cmpf ogt, %5, %6 : vector<16x128xf32>
    %cst_6 = arith.constant 0.000000e+00 : f32
    %8 = vector.broadcast %cst_6 : f32 to vector<16x128xf32>
    %9 = arith.minimumf %5, %8 : vector<16x128xf32>
    %10 = math.exp %9 : vector<16x128xf32>
    %cst_7 = arith.constant 1.000000e+00 : f32
    %11 = vector.broadcast %cst_7 : f32 to vector<16x128xf32>
    %12 = arith.subf %10, %11 : vector<16x128xf32>
    %13 = arith.select %7, %5, %12 : vector<16x128xi1>, vector<16x128xf32>
    %14 = arith.truncf %13 : vector<16x128xf32> to vector<16x128xbf16>
    %c0_8 = arith.constant 0 : index
    %c0_9 = arith.constant 0 : index
    %15 = vector.load %arg4[%c0_8, %c0_9] : memref<128x128xbf16, #tpu.memory_space<vmem>>, vector<128x128xbf16>
    %cst_10 = arith.constant dense<0.000000e+00> : vector<16x128xf32>
    %16 = tpu.matmul %14, %15, %cst_10 {dimension_numbers = #tpu.dot_dimension_numbers<[1], [0], [0], [1], [0, 0, 1, 1], [], []>} : vector<16x128xbf16>, vector<128x128xbf16>, vector<16x128xf32> -> vector<16x128xf32>
    %c0_11 = arith.constant 0 : index
    %c0_12 = arith.constant 0 : index
    %17 = vector.load %arg5[%c0_11, %c0_12] : memref<1x128xf32, #tpu.memory_space<vmem>>, vector<1x128xf32>
    %18 = vector.broadcast %17 : vector<1x128xf32> to vector<16x128xf32>
    %19 = arith.addf %16, %18 : vector<16x128xf32>
    %cst_13 = arith.constant 0.000000e+00 : f32
    %20 = vector.broadcast %cst_13 : f32 to vector<16x128xf32>
    %21 = arith.subf %20, %19 : vector<16x128xf32>
    %22 = math.exp %21 : vector<16x128xf32>
    %cst_14 = arith.constant 1.000000e+00 : f32
    %23 = vector.broadcast %cst_14 : f32 to vector<16x128xf32>
    %24 = arith.addf %23, %22 : vector<16x128xf32>
    %25 = tpu.reciprocal %24 {approx = true} : vector<16x128xf32> -> vector<16x128xf32>
    %c0_15 = arith.constant 0 : index
    %c0_16 = arith.constant 0 : index
    %26 = vector.load %arg6[%c0_15, %c0_16] : memref<16x128xf32, #tpu.memory_space<vmem>>, vector<16x128xf32>
    tpu.vector_store %arg6[%c0_15, %c0_16], %25 {strides = array<i32>} : memref<16x128xf32, #tpu.memory_space<vmem>>, vector<16x128xf32>,
    return
  }
  func.func @transform_0(%arg0: i32) -> (i32, i32) {
    %c0_i32 = arith.constant 0 : i32
    %c0_i32_0 = arith.constant 0 : i32
    return %arg0, %c0_i32 : i32, i32
  }
  func.func @transform_1(%arg0: i32) -> (i32, i32) {
    %c0_i32 = arith.constant 0 : i32
    %c0_i32_0 = arith.constant 0 : i32
    %c0_i32_1 = arith.constant 0 : i32
    return %c0_i32, %c0_i32_0 : i32, i32
  }
  func.func @transform_2(%arg0: i32) -> (i32, i32) {
    %c0_i32 = arith.constant 0 : i32
    %c0_i32_0 = arith.constant 0 : i32
    %c0_i32_1 = arith.constant 0 : i32
    return %c0_i32, %c0_i32_0 : i32, i32
  }
  func.func @transform_3(%arg0: i32) -> (i32, i32) {
    %c0_i32 = arith.constant 0 : i32
    %c0_i32_0 = arith.constant 0 : i32
    %c0_i32_1 = arith.constant 0 : i32
    return %c0_i32, %c0_i32_0 : i32, i32
  }
  func.func @transform_4(%arg0: i32) -> (i32, i32) {
    %c0_i32 = arith.constant 0 : i32
    %c0_i32_0 = arith.constant 0 : i32
    %c0_i32_1 = arith.constant 0 : i32
    return %c0_i32, %c0_i32_0 : i32, i32
  }
  func.func @transform_5(%arg0: i32) -> (i32, i32) {
    %c0_i32 = arith.constant 0 : i32
    %c0_i32_0 = arith.constant 0 : i32
    return %arg0, %c0_i32 : i32, i32
  }
}

module attributes {stable_mosaic.version = 11 : i64} {
  func.func @_proj_enc_kernel(%arg0: i32, %arg1: memref<16x8xbf16, #tpu.memory_space<vmem>>, %arg2: memref<8x128xbf16, #tpu.memory_space<vmem>>, %arg3: memref<1x128xf32, #tpu.memory_space<vmem>>, %arg4: memref<128x128xbf16, #tpu.memory_space<vmem>>, %arg5: memref<1x128xf32, #tpu.memory_space<vmem>>, %arg6: memref<16x128xf32, #tpu.memory_space<vmem>>) attributes {dimension_semantics = [#tpu.dimension_semantics<parallel>], iteration_bounds = array<i64: 1>, scalar_prefetch = 0 : i64, scratch_operands = 0 : i64, tpu.core_type = #tpu.core_type<tc>, window_params = [{transform_indices = @transform_0, window_bounds = array<i64: 16, 8>}, {pipeline_mode = #tpu.pipeline_mode<synchronous>, transform_indices = @transform_1, window_bounds = array<i64: 8, 128>}, {pipeline_mode = #tpu.pipeline_mode<synchronous>, transform_indices = @transform_2, window_bounds = array<i64: 1, 128>}, {pipeline_mode = #tpu.pipeline_mode<synchronous>, transform_indices = @transform_3, window_bounds = array<i64: 128, 128>}, {pipeline_mode = #tpu.pipeline_mode<synchronous>, transform_indices = @transform_4, window_bounds = array<i64: 1, 128>}, {transform_indices = @transform_5, window_bounds = array<i64: 16, 128>}]} {
    %c0 = arith.constant 0 : index
    %c0_0 = arith.constant 0 : index
    %0 = vector.load %arg1[%c0, %c0_0] : memref<16x8xbf16, #tpu.memory_space<vmem>>, vector<16x8xbf16>
    %c0_1 = arith.constant 0 : index
    %c0_2 = arith.constant 0 : index
    %1 = vector.load %arg2[%c0_1, %c0_2] : memref<8x128xbf16, #tpu.memory_space<vmem>>, vector<8x128xbf16>
    %cst = arith.constant dense<0.000000e+00> : vector<16x128xf32>
    %2 = tpu.matmul %0, %1, %cst {dimension_numbers = #tpu.dot_dimension_numbers<[1], [0], [0], [1], [0, 0, 1, 1], [], []>} : vector<16x8xbf16>, vector<8x128xbf16>, vector<16x128xf32> -> vector<16x128xf32>
    %c0_3 = arith.constant 0 : index
    %c0_4 = arith.constant 0 : index
    %3 = vector.load %arg3[%c0_3, %c0_4] : memref<1x128xf32, #tpu.memory_space<vmem>>, vector<1x128xf32>
    %4 = vector.broadcast %3 : vector<1x128xf32> to vector<16x128xf32>
    %5 = arith.addf %2, %4 : vector<16x128xf32>
    %cst_5 = arith.constant 0.000000e+00 : f32
    %6 = vector.broadcast %cst_5 : f32 to vector<16x128xf32>
    %7 = arith.cmpf ogt, %5, %6 : vector<16x128xf32>
    %cst_6 = arith.constant 0.000000e+00 : f32
    %8 = vector.broadcast %cst_6 : f32 to vector<16x128xf32>
    %9 = arith.minimumf %5, %8 : vector<16x128xf32>
    %10 = math.exp %9 : vector<16x128xf32>
    %cst_7 = arith.constant 1.000000e+00 : f32
    %11 = vector.broadcast %cst_7 : f32 to vector<16x128xf32>
    %12 = arith.subf %10, %11 : vector<16x128xf32>
    %13 = arith.select %7, %5, %12 : vector<16x128xi1>, vector<16x128xf32>
    %14 = arith.truncf %13 : vector<16x128xf32> to vector<16x128xbf16>
    %c0_8 = arith.constant 0 : index
    %c0_9 = arith.constant 0 : index
    %15 = vector.load %arg4[%c0_8, %c0_9] : memref<128x128xbf16, #tpu.memory_space<vmem>>, vector<128x128xbf16>
    %cst_10 = arith.constant dense<0.000000e+00> : vector<16x128xf32>
    %16 = tpu.matmul %14, %15, %cst_10 {dimension_numbers = #tpu.dot_dimension_numbers<[1], [0], [0], [1], [0, 0, 1, 1], [], []>} : vector<16x128xbf16>, vector<128x128xbf16>, vector<16x128xf32> -> vector<16x128xf32>
    %c0_11 = arith.constant 0 : index
    %c0_12 = arith.constant 0 : index
    %17 = vector.load %arg5[%c0_11, %c0_12] : memref<1x128xf32, #tpu.memory_space<vmem>>, vector<1x128xf32>
    %18 = vector.broadcast %17 : vector<1x128xf32> to vector<16x128xf32>
    %19 = arith.addf %16, %18 : vector<16x128xf32>
    %cst_13 = arith.constant 0.000000e+00 : f32
    %20 = vector.broadcast %cst_13 : f32 to vector<16x128xf32>
    %21 = arith.subf %20, %19 : vector<16x128xf32>
    %22 = math.exp %21 : vector<16x128xf32>
    %cst_14 = arith.constant 1.000000e+00 : f32
    %23 = vector.broadcast %cst_14 : f32 to vector<16x128xf32>
    %24 = arith.addf %23, %22 : vector<16x128xf32>
    %25 = tpu.reciprocal %24 {approx = true} : vector<16x128xf32> -> vector<16x128xf32>
    %c0_15 = arith.constant 0 : index
    %c0_16 = arith.constant 0 : index
    %26 = vector.load %arg6[%c0_15, %c0_16] : memref<16x128xf32, #tpu.memory_space<vmem>>, vector<16x128xf32>
    tpu.vector_store %arg6[%c0_15, %c0_16], %25 {strides = array<i32>} : memref<16x128xf32, #tpu.memory_space<vmem>>, vector<16x128xf32>,
    return
  }
  func.func @transform_0(%arg0: i32) -> (i32, i32) {
    %c0_i32 = arith.constant 0 : i32
    %c0_i32_0 = arith.constant 0 : i32
    return %arg0, %c0_i32 : i32, i32
  }
  func.func @transform_1(%arg0: i32) -> (i32, i32) {
    %c0_i32 = arith.constant 0 : i32
    %c0_i32_0 = arith.constant 0 : i32
    %c0_i32_1 = arith.constant 0 : i32
    return %c0_i32, %c0_i32_0 : i32, i32
  }
  func.func @transform_2(%arg0: i32) -> (i32, i32) {
    %c0_i32 = arith.constant 0 : i32
    %c0_i32_0 = arith.constant 0 : i32
    %c0_i32_1 = arith.constant 0 : i32
    return %c0_i32, %c0_i32_0 : i32, i32
  }
  func.func @transform_3(%arg0: i32) -> (i32, i32) {
    %c0_i32 = arith.constant 0 : i32
    %c0_i32_0 = arith.constant 0 : i32
    %c0_i32_1 = arith.constant 0 : i32
    return %c0_i32, %c0_i32_0 : i32, i32
  }
  func.func @transform_4(%arg0: i32) -> (i32, i32) {
    %c0_i32 = arith.constant 0 : i32
    %c0_i32_0 = arith.constant 0 : i32
    %c0_i32_1 = arith.constant 0 : i32
    return %c0_i32, %c0_i32_0 : i32, i32
  }
  func.func @transform_5(%arg0: i32) -> (i32, i32) {
    %c0_i32 = arith.constant 0 : i32
    %c0_i32_0 = arith.constant 0 : i32
    return %arg0, %c0_i32 : i32, i32
  }
}

</mosaic_0001>

<llo_original>
// kernel: _proj_enc_impl.1
$region0: #{_proj_enc_impl.1}
  #allocation0 [shape = 'u32[]', space=smem, size = 0x4, offset = 0x4, fixed_abs, tag = 'smem constant byte address 0x4 - core index']
  #allocation1 [shape = 'u32[72,128]{1,0:T(1,128)}', space=vmem, size = 0x9000, scoped, tag = 'internal scratch']
  %s0 = inlined_call_operand.vmem [shape: bf16[16,8], index: 0, kind: input, shape index: {}]
  %s1 = inlined_call_operand.vmem [shape: bf16[8,128], index: 1, kind: input, shape index: {}]
  %s2 = inlined_call_operand.vmem [shape: f32[1,128], index: 2, kind: input, shape index: {}]
  %s3 = inlined_call_operand.vmem [shape: bf16[128,128], index: 3, kind: input, shape index: {}]
  %s4 = inlined_call_operand.vmem [shape: f32[1,128], index: 4, kind: input, shape index: {}]
  %s5 = inlined_call_operand.vmem [shape: f32[16,128], index: 5, kind: output, shape index: {}]
  %s6 = sld [smem:[#allocation0]]
  $region30: #{_proj_enc_impl.1} parent=0
    _
  %s8 = ssub.s32 1, %s6
  %s9 = scalar_select 0, %s8, %s6
  // Predicated region
  $region2: #{_proj_enc_impl.1} parent=0 // pred_check
    _
  $region3: #{_proj_enc_impl.1} parent=0 // pred_check_branch
    %11 = sbr.rel (0) target = $region5
  $region4: #{_proj_enc_impl.1} parent=0 // pred_region
    _
  $region5: #{_proj_enc_impl.1} parent=0 // pred_fallthru
    _
  // Predicated region
  $region6: #{_proj_enc_impl.1} parent=0 // pred_check
    _
  $region7: #{_proj_enc_impl.1} parent=0 // pred_check_branch
    %13 = sbr.rel (0) target = $region9
  $region8: #{_proj_enc_impl.1} parent=0 // pred_region
    _
  $region9: #{_proj_enc_impl.1} parent=0 // pred_fallthru
    _
  // Predicated region
  $region10: #{_proj_enc_impl.1} parent=0 // pred_check
    _
  $region11: #{_proj_enc_impl.1} parent=0 // pred_check_branch
    %15 = sbr.rel (0) target = $region13
  $region12: #{_proj_enc_impl.1} parent=0 // pred_region
    _
  $region13: #{_proj_enc_impl.1} parent=0 // pred_fallthru
    _
  // Predicated region
  $region14: #{_proj_enc_impl.1} parent=0 // pred_check
    _
  $region15: #{_proj_enc_impl.1} parent=0 // pred_check_branch
    %17 = sbr.rel (0) target = $region17
  $region16: #{_proj_enc_impl.1} parent=0 // pred_region
    _
  $region17: #{_proj_enc_impl.1} parent=0 // pred_fallthru
    _
  // Predicated region
  $region18: #{_proj_enc_impl.1} parent=0 // pred_check
    _
  $region19: #{_proj_enc_impl.1} parent=0 // pred_check_branch
    %19 = sbr.rel (0) target = $region21
  $region20: #{_proj_enc_impl.1} parent=0 // pred_region
    _
  $region21: #{_proj_enc_impl.1} parent=0 // pred_fallthru
    _
  %v21 = vld [vmem:[%s0] sm:$0xf]
  %v22 = vld [vmem:[%s0 + $0x4] sm:$0xf]
  %v23 = vld [vmem:[%s1] sm:$0xf]
  %v24 = vld [vmem:[%s2] sm:$0x1]
  %v26 = vperm.slane %v24, 0
  %v30 = vunpack.c.l.b16 %v21
  %v31 = vunpack.c.l.b16 %v22
  %v32 = vpack.c.b16 %v31, %v30
  %vm33 = vcmask 64512
  %v35 = vsel %vm33, %v32, 0
  %vm37 = vcmask 1043456
  %v39 = vsel %vm37, %v23, 0
  %41 = vmatpush.bf16.msra.mxu0 0
  %42 = vmatpush.bf16.msra.mxu0 0
  %43 = vmatpush.bf16.msra.mxu0 0
  %44 = vmatpush.bf16.msra.mxu0 0
  %45 = vmatpush.bf16.msra.mxu0 0
  %46 = vmatpush.bf16.msra.mxu0 0
  %47 = vmatpush.bf16.msra.mxu0 0
  %48 = vmatpush.bf16.msra.mxu0 %v39
  %49 = vmatmul.bf16.gmra.mxu0 %v35
  %v50 = vpop.f32.mrf.mxu0
  %v51 = vadd.f32 %v26, %v50
  %v52 = vpop.f32.mrf.mxu0
  %v53 = vadd.f32 %v26, %v52
  %54 = vdwg.mxu0
  %vm55 = vcmp.gt.f32.partialorder %v51, 0.0
  %vm56 = vcmp.gt.f32.partialorder %v53, 0.0
  %v57 = vmin.f32 %v51, 0.0
  %v58 = vmin.f32 %v53, 0.0
  %v59 = vmul.f32 %v57, 1.442695
  %v60 = vpow.pop %v59
  %v61 = vmul.f32 %v58, 1.442695
  %v62 = vpow.pop %v61
  %v63 = vsub.f32 %v60, 1.0
  %v64 = vsub.f32 %v62, 1.0
  %v65 = vsel %vm55, %v51, %v63
  %v66 = vsel %vm56, %v53, %v64
  %v67 = vpack.c.bf16 %v66, %v65
  %v68 = vld [vmem:[%s3] sm:$0xf]
  %v69 = vld [vmem:[%s3 + $0x4] sm:$0xf]
  %v70 = vld [vmem:[%s3 + $0x8] sm:$0xf]
  %v71 = vld [vmem:[%s3 + $0xc] sm:$0xf]
  %v72 = vld [vmem:[%s3 + $0x10] sm:$0xf]
  %v73 = vld [vmem:[%s3 + $0x14] sm:$0xf]
  %v74 = vld [vmem:[%s3 + $0x18] sm:$0xf]
  %v75 = vld [vmem:[%s3 + $0x1c] sm:$0xf]
  %v76 = vld [vmem:[%s3 + $0x20] sm:$0xf]
  %v77 = vld [vmem:[%s3 + $0x24] sm:$0xf]
  %v78 = vld [vmem:[%s3 + $0x28] sm:$0xf]
  %v79 = vld [vmem:[%s3 + $0x2c] sm:$0xf]
  %v80 = vld [vmem:[%s3 + $0x30] sm:$0xf]
  %v81 = vld [vmem:[%s3 + $0x34] sm:$0xf]
  %v82 = vld [vmem:[%s3 + $0x38] sm:$0xf]
  %v83 = vld [vmem:[%s3 + $0x3c] sm:$0xf]
  %v84 = vld [vmem:[%s4] sm:$0x1]
  %v86 = vperm.slane %v84, 0
  %v104 = vunpack.c.l.b16 %v68
  %v105 = vunpack.c.l.b16 %v69
  %v106 = vunpack.c.l.b16 %v70
  %v107 = vunpack.c.l.b16 %v71
  %v108 = vunpack.c.l.b16 %v72
  %v109 = vunpack.c.l.b16 %v73
  %v110 = vunpack.c.l.b16 %v74
  %v111 = vunpack.c.l.b16 %v75
  %v112 = vunpack.c.l.b16 %v76
  %v113 = vunpack.c.l.b16 %v77
  %v114 = vunpack.c.l.b16 %v78
  %v115 = vunpack.c.l.b16 %v79
  %v116 = vunpack.c.l.b16 %v80
  %v117 = vunpack.c.l.b16 %v81
  %v118 = vunpack.c.l.b16 %v82
  %v119 = vunpack.c.l.b16 %v83
  %v120 = vpack.c.b16 %v105, %v104
  %v121 = vpack.c.b16 %v107, %v106
  %v122 = vpack.c.b16 %v109, %v108
  %v123 = vpack.c.b16 %v111, %v110
  %v124 = vpack.c.b16 %v113, %v112
  %v125 = vpack.c.b16 %v115, %v114
  %v126 = vpack.c.b16 %v117, %v116
  %v127 = vpack.c.b16 %v119, %v118
  %136 = vmatpush.bf16.msra.mxu0 %v127
  %137 = vmatpush.bf16.msra.mxu0 %v126
  %138 = vmatpush.bf16.msra.mxu0 %v125
  %139 = vmatpush.bf16.msra.mxu0 %v124
  %140 = vmatpush.bf16.msra.mxu0 %v123
  %141 = vmatpush.bf16.msra.mxu0 %v122
  %142 = vmatpush.bf16.msra.mxu0 %v121
  %143 = vmatpush.bf16.msra.mxu0 %v120
  %144 = vmatmul.bf16.gmra.mxu0 %v67
  %v145 = vpop.f32.mrf.mxu0
  %v146 = vadd.f32 %v86, %v145
  %v147 = vpop.f32.mrf.mxu0
  %v148 = vadd.f32 %v86, %v147
  %149 = vdwg.mxu0
  %v150 = vsub.f32 0.0, %v146
  %v151 = vsub.f32 0.0, %v148
  %v152 = vmul.f32 %v150, 1.442695
  %v153 = vpow.pop %v152
  %v154 = vmul.f32 %v151, 1.442695
  %v155 = vpow.pop %v154
  %v156 = vadd.f32 %v153, 1.0
  %v157 = vadd.f32 %v155, 1.0
  %v158 = vrcp.pop %v156
  %v159 = vrcp.pop %v157
  %160 = vst [vmem:[%s5] sm:$0xff] %v158
  %161 = vst [vmem:[%s5 + $0x8] sm:$0xff] %v159
  // Predicated region
  $region22: #{_proj_enc_impl.1} parent=0 // pred_check
    _
  $region23: #{_proj_enc_impl.1} parent=0 // pred_check_branch
    %163 = sbr.rel (0) target = $region25
  $region24: #{_proj_enc_impl.1} parent=0 // pred_region
    _
  $region25: #{_proj_enc_impl.1} parent=0 // pred_fallthru
    _
  // Predicated region
  $region26: #{_proj_enc_impl.1} parent=0 // pred_check
    _
  $region27: #{_proj_enc_impl.1} parent=0 // pred_check_branch
    %165 = sbr.rel (0) target = $region29
  $region28: #{_proj_enc_impl.1} parent=0 // pred_region
    _
  $region29: #{_proj_enc_impl.1} parent=0 // pred_fallthru
    _

// kernel: _proj_enc_impl.1
$region0: #{_proj_enc_impl.1}
  #allocation0 [shape = 'u32[]', space=smem, size = 0x4, offset = 0x4, fixed_abs, tag = 'smem constant byte address 0x4 - core index']
  #allocation1 [shape = 'u32[72,128]{1,0:T(1,128)}', space=vmem, size = 0x9000, scoped, tag = 'internal scratch']
  %s0 = inlined_call_operand.vmem [shape: bf16[16,8], index: 0, kind: input, shape index: {}]
  %s1 = inlined_call_operand.vmem [shape: bf16[8,128], index: 1, kind: input, shape index: {}]
  %s2 = inlined_call_operand.vmem [shape: f32[1,128], index: 2, kind: input, shape index: {}]
  %s3 = inlined_call_operand.vmem [shape: bf16[128,128], index: 3, kind: input, shape index: {}]
  %s4 = inlined_call_operand.vmem [shape: f32[1,128], index: 4, kind: input, shape index: {}]
  %s5 = inlined_call_operand.vmem [shape: f32[16,128], index: 5, kind: output, shape index: {}]
  %s6 = sld [smem:[#allocation0]]
  $region30: #{_proj_enc_impl.1} parent=0
    _
  %s8 = ssub.s32 1, %s6
  %s9 = scalar_select 0, %s8, %s6
  // Predicated region
  $region2: #{_proj_enc_impl.1} parent=0 // pred_check
    _
  $region3: #{_proj_enc_impl.1} parent=0 // pred_check_branch
    %11 = sbr.rel (0) target = $region5
  $region4: #{_proj_enc_impl.1} parent=0 // pred_region
    _
  $region5: #{_proj_enc_impl.1} parent=0 // pred_fallthru
    _
  // Predicated region
  $region6: #{_proj_enc_impl.1} parent=0 // pred_check
    _
  $region7: #{_proj_enc_impl.1} parent=0 // pred_check_branch
    %13 = sbr.rel (0) target = $region9
  $region8: #{_proj_enc_impl.1} parent=0 // pred_region
    _
  $region9: #{_proj_enc_impl.1} parent=0 // pred_fallthru
    _
  // Predicated region
  $region10: #{_proj_enc_impl.1} parent=0 // pred_check
    _
  $region11: #{_proj_enc_impl.1} parent=0 // pred_check_branch
    %15 = sbr.rel (0) target = $region13
  $region12: #{_proj_enc_impl.1} parent=0 // pred_region
    _
  $region13: #{_proj_enc_impl.1} parent=0 // pred_fallthru
    _
  // Predicated region
  $region14: #{_proj_enc_impl.1} parent=0 // pred_check
    _
  $region15: #{_proj_enc_impl.1} parent=0 // pred_check_branch
    %17 = sbr.rel (0) target = $region17
  $region16: #{_proj_enc_impl.1} parent=0 // pred_region
    _
  $region17: #{_proj_enc_impl.1} parent=0 // pred_fallthru
    _
  // Predicated region
  $region18: #{_proj_enc_impl.1} parent=0 // pred_check
    _
  $region19: #{_proj_enc_impl.1} parent=0 // pred_check_branch
    %19 = sbr.rel (0) target = $region21
  $region20: #{_proj_enc_impl.1} parent=0 // pred_region
    _
  $region21: #{_proj_enc_impl.1} parent=0 // pred_fallthru
    _
  %v21 = vld [vmem:[%s0] sm:$0xf]
  %v22 = vld [vmem:[%s0 + $0x4] sm:$0xf]
  %v23 = vld [vmem:[%s1] sm:$0xf]
  %v24 = vld [vmem:[%s2] sm:$0x1]
  %v26 = vperm.slane %v24, 0
  %v30 = vunpack.c.l.b16 %v21
  %v31 = vunpack.c.l.b16 %v22
  %v32 = vpack.c.b16 %v31, %v30
  %vm33 = vcmask 64512
  %v35 = vsel %vm33, %v32, 0
  %vm37 = vcmask 1043456
  %v39 = vsel %vm37, %v23, 0
  %41 = vmatpush.bf16.msra.mxu0 0
  %42 = vmatpush.bf16.msra.mxu0 0
  %43 = vmatpush.bf16.msra.mxu0 0
  %44 = vmatpush.bf16.msra.mxu0 0
  %45 = vmatpush.bf16.msra.mxu0 0
  %46 = vmatpush.bf16.msra.mxu0 0
  %47 = vmatpush.bf16.msra.mxu0 0
  %48 = vmatpush.bf16.msra.mxu0 %v39
  %49 = vmatmul.bf16.gmra.mxu0 %v35
  %v50 = vpop.f32.mrf.mxu0
  %v51 = vadd.f32 %v26, %v50
  %v52 = vpop.f32.mrf.mxu0
  %v53 = vadd.f32 %v26, %v52
  %54 = vdwg.mxu0
  %vm55 = vcmp.gt.f32.partialorder %v51, 0.0
  %vm56 = vcmp.gt.f32.partialorder %v53, 0.0
  %v57 = vmin.f32 %v51, 0.0
  %v58 = vmin.f32 %v53, 0.0
  %v59 = vmul.f32 %v57, 1.442695
  %v60 = vpow.pop %v59
  %v61 = vmul.f32 %v58, 1.442695
  %v62 = vpow.pop %v61
  %v63 = vsub.f32 %v60, 1.0
  %v64 = vsub.f32 %v62, 1.0
  %v65 = vsel %vm55, %v51, %v63
  %v66 = vsel %vm56, %v53, %v64
  %v67 = vpack.c.bf16 %v66, %v65
  %v68 = vld [vmem:[%s3] sm:$0xf]
  %v69 = vld [vmem:[%s3 + $0x4] sm:$0xf]
  %v70 = vld [vmem:[%s3 + $0x8] sm:$0xf]
  %v71 = vld [vmem:[%s3 + $0xc] sm:$0xf]
  %v72 = vld [vmem:[%s3 + $0x10] sm:$0xf]
  %v73 = vld [vmem:[%s3 + $0x14] sm:$0xf]
  %v74 = vld [vmem:[%s3 + $0x18] sm:$0xf]
  %v75 = vld [vmem:[%s3 + $0x1c] sm:$0xf]
  %v76 = vld [vmem:[%s3 + $0x20] sm:$0xf]
  %v77 = vld [vmem:[%s3 + $0x24] sm:$0xf]
  %v78 = vld [vmem:[%s3 + $0x28] sm:$0xf]
  %v79 = vld [vmem:[%s3 + $0x2c] sm:$0xf]
  %v80 = vld [vmem:[%s3 + $0x30] sm:$0xf]
  %v81 = vld [vmem:[%s3 + $0x34] sm:$0xf]
  %v82 = vld [vmem:[%s3 + $0x38] sm:$0xf]
  %v83 = vld [vmem:[%s3 + $0x3c] sm:$0xf]
  %v84 = vld [vmem:[%s4] sm:$0x1]
  %v86 = vperm.slane %v84, 0
  %v104 = vunpack.c.l.b16 %v68
  %v105 = vunpack.c.l.b16 %v69
  %v106 = vunpack.c.l.b16 %v70
  %v107 = vunpack.c.l.b16 %v71
  %v108 = vunpack.c.l.b16 %v72
  %v109 = vunpack.c.l.b16 %v73
  %v110 = vunpack.c.l.b16 %v74
  %v111 = vunpack.c.l.b16 %v75
  %v112 = vunpack.c.l.b16 %v76
  %v113 = vunpack.c.l.b16 %v77
  %v114 = vunpack.c.l.b16 %v78
  %v115 = vunpack.c.l.b16 %v79
  %v116 = vunpack.c.l.b16 %v80
  %v117 = vunpack.c.l.b16 %v81
  %v118 = vunpack.c.l.b16 %v82
  %v119 = vunpack.c.l.b16 %v83
  %v120 = vpack.c.b16 %v105, %v104
  %v121 = vpack.c.b16 %v107, %v106
  %v122 = vpack.c.b16 %v109, %v108
  %v123 = vpack.c.b16 %v111, %v110
  %v124 = vpack.c.b16 %v113, %v112
  %v125 = vpack.c.b16 %v115, %v114
  %v126 = vpack.c.b16 %v117, %v116
  %v127 = vpack.c.b16 %v119, %v118
  %136 = vmatpush.bf16.msra.mxu0 %v127
  %137 = vmatpush.bf16.msra.mxu0 %v126
  %138 = vmatpush.bf16.msra.mxu0 %v125
  %139 = vmatpush.bf16.msra.mxu0 %v124
  %140 = vmatpush.bf16.msra.mxu0 %v123
  %141 = vmatpush.bf16.msra.mxu0 %v122
  %142 = vmatpush.bf16.msra.mxu0 %v121
  %143 = vmatpush.bf16.msra.mxu0 %v120
  %144 = vmatmul.bf16.gmra.mxu0 %v67
  %v145 = vpop.f32.mrf.mxu0
  %v146 = vadd.f32 %v86, %v145
  %v147 = vpop.f32.mrf.mxu0
  %v148 = vadd.f32 %v86, %v147
  %149 = vdwg.mxu0
  %v150 = vsub.f32 0.0, %v146
  %v151 = vsub.f32 0.0, %v148
  %v152 = vmul.f32 %v150, 1.442695
  %v153 = vpow.pop %v152
  %v154 = vmul.f32 %v151, 1.442695
  %v155 = vpow.pop %v154
  %v156 = vadd.f32 %v153, 1.0
  %v157 = vadd.f32 %v155, 1.0
  %v158 = vrcp.pop %v156
  %v159 = vrcp.pop %v157
  %160 = vst [vmem:[%s5] sm:$0xff] %v158
  %161 = vst [vmem:[%s5 + $0x8] sm:$0xff] %v159
  // Predicated region
  $region22: #{_proj_enc_impl.1} parent=0 // pred_check
    _
  $region23: #{_proj_enc_impl.1} parent=0 // pred_check_branch
    %163 = sbr.rel (0) target = $region25
  $region24: #{_proj_enc_impl.1} parent=0 // pred_region
    _
  $region25: #{_proj_enc_impl.1} parent=0 // pred_fallthru
    _
  // Predicated region
  $region26: #{_proj_enc_impl.1} parent=0 // pred_check
    _
  $region27: #{_proj_enc_impl.1} parent=0 // pred_check_branch
    %165 = sbr.rel (0) target = $region29
  $region28: #{_proj_enc_impl.1} parent=0 // pred_region
    _
  $region29: #{_proj_enc_impl.1} parent=0 // pred_fallthru
    _

</llo_original>
